<compile_context>
chip_gen: v6e
topology: v6e:2x2x1
jax: 0.10.0
libtpu: 0.0.40
codegen_flags: <defaults>
</compile_context>

<pallas_src>
import functools

import jax
import jax.numpy as jnp
from jax import lax
from jax.experimental import pallas as pl
from jax.experimental.pallas import tpu as pltpu


# ----------------------------- kernel -------------------------------------- #

def _ortho_loss_kernel(out_ref, tgt_ref, w1t_ref, b1_ref, gamma_ref, beta_ref,
                       w2t_ref, b2_ref, loss_ref,
                       mse_acc, bn_sum, bn_sq, orth_acc, *,
                       alpha, n_valid, tile_n, inv_n, inv_mse_den, mm_dtype):
    """Fused OrthoLoss forward over a (phase, row-tile) grid.

       phase 0: accumulate MSE partial + BatchNorm sum / sum-of-squares
       phase 1: normalize, second Linear+Tanh, accumulate ||f||^2, finalize.
    """
    f32 = jnp.float32
    phase = pl.program_id(0)
    t = pl.program_id(1)

    @pl.when(jnp.logical_and(phase == 0, t == 0))
    def _init():
        mse_acc[...] = jnp.zeros_like(mse_acc)
        orth_acc[...] = jnp.zeros_like(orth_acc)
        bn_sum[...] = jnp.zeros_like(bn_sum)
        bn_sq[...] = jnp.zeros_like(bn_sq)

    tgt = tgt_ref[...].astype(f32)
    # Row-validity mask: the last tile may extend past N (garbage rows).
    row_ids = t * tile_n + lax.broadcasted_iota(jnp.int32, (tile_n, 1), 0)
    valid = row_ids < n_valid                                    # (tile_n, 1) bool

    # First Linear + Tanh (recomputed in phase 1 instead of spilling h1 to HBM;
    # w1 stays resident in VMEM, so the re-matmul is cheaper than HBM traffic).
    h1 = jnp.tanh(
        jnp.dot(tgt.astype(mm_dtype), w1t_ref[...],
                preferred_element_type=f32) + b1_ref[...])
    h1 = jnp.where(valid, h1, 0.0)                               # kill garbage rows

    @pl.when(phase == 0)
    def _phase0():
        # MSE partial (padded rows masked; feature dim is unpadded -> exact).
        diff = jnp.where(valid, out_ref[...].astype(f32) - tgt, 0.0)
        mse_acc[...] += jnp.sum(diff * diff, keepdims=True)
        # BatchNorm batch statistics via ones-row MXU matmuls (keeps the XLU free).
        ones_r = jnp.ones((1, tile_n), f32)
        bn_sum[...] += jnp.dot(ones_r, h1, preferred_element_type=f32)
        bn_sq[...] += jnp.dot(ones_r, h1 * h1, preferred_element_type=f32)

    @pl.when(phase == 1)
    def _phase1():
        # BatchNorm1d training mode: batch mean, biased variance, eps = 1e-5.
        mean = bn_sum[...] * inv_n
        var = jnp.maximum(bn_sq[...] * inv_n - mean * mean, 0.0)
        hn = (h1 - mean) * lax.rsqrt(var + 1e-5) * gamma_ref[...] + beta_ref[...]

        f = jnp.tanh(
            jnp.dot(hn.astype(mm_dtype), w2t_ref[...],
                    preferred_element_type=f32) + b2_ref[...])

        row_sq = jnp.where(valid, jnp.sum(f * f, axis=-1, keepdims=True), 0.0)
        orth_acc[...] += jnp.sum(row_sq, keepdims=True)

        @pl.when(t == pl.num_programs(1) - 1)
        def _finalize():
            repr_loss = mse_acc[...] * inv_mse_den
            orth_loss = orth_acc[...] * inv_n - 1.0
            loss_ref[...] = repr_loss + alpha * orth_loss


# ----------------------------- wrapper -------------------------------------- #

def _round_up(x, m):
    return (x + m - 1) // m * m


def prepare_enc_params(enc_params, matmul_dtype=jnp.bfloat16):
    """One-time encoder-weight prep (hoisted out of the per-step path):
       transpose to contraction-dim-leading, pad feature dims to 128 lanes,
       cast the MXU operands to `matmul_dtype` (bf16 default for v6e/v7x)."""
    f32 = jnp.float32
    w1 = jnp.asarray(enc_params["w1"], f32)          # (d1, d0)  PyTorch Linear layout
    w2 = jnp.asarray(enc_params["w2"], f32)          # (d2, d1)
    d1, _ = w1.shape
    d2, _ = w2.shape
    d1_p = _round_up(d1, 128)
    d2_p = _round_up(d2, 128)

    def row(v, cols):
        v = jnp.asarray(v, f32).reshape(1, -1)
        return jnp.pad(v, ((0, 0), (0, cols - v.shape[1])))

    # Zero padding is exact: padded weight rows/cols, biases, gamma, beta are 0
    # so padded feature columns stay identically 0 through tanh/BN/matmul2.
    w1t = jnp.pad(w1.T, ((0, 0), (0, d1_p - d1))).astype(matmul_dtype)           # (d0, d1_p)
    w2t = jnp.pad(w2.T, ((0, d1_p - d1), (0, d2_p - d2))).astype(matmul_dtype)   # (d1_p, d2_p)
    return {
        "w1t": w1t, "b1": row(enc_params["b1"], d1_p),
        "gamma": row(enc_params["gamma"], d1_p), "beta": row(enc_params["beta"], d1_p),
        "w2t": w2t, "b2": row(enc_params["b2"], d2_p),
    }


@functools.partial(jax.jit, static_argnames=("alpha", "tile_n"))
def ortho_loss_forward(output, target, prep, *, alpha, tile_n=256):
    """loss = MSE(output, target) + alpha * mean(sum(enc(target)^2, -1) - 1)."""
    n, d0 = target.shape
    d1_p = prep["w1t"].shape[1]
    d2_p = prep["w2t"].shape[1]
    mm_dtype = prep["w1t"].dtype
    f32 = jnp.float32

    # Row tile: multiple of 8 sublanes; >=256 fills the MXU M dim on v6e/v7x.
    tile_n = _round_up(min(tile_n, _round_up(n, 8)), 8)
    num_tiles = pl.cdiv(n, tile_n)

    kernel = functools.partial(
        _ortho_loss_kernel,
        alpha=float(alpha), n_valid=int(n), tile_n=int(tile_n),
        inv_n=1.0 / float(n), inv_mse_den=1.0 / float(n * d0),
        mm_dtype=mm_dtype,
    )

    row_tile = lambda p, t: (t, 0)          # re-read each phase
    pinned = lambda p, t: (0, 0)            # resident (weights / scalars)
    out_map = lambda p, t: (t * (1 - p), 0)  # only needed in phase 0; pinned after

    loss = pl.pallas_call(
        kernel,
        out_shape=jax.ShapeDtypeStruct((1, 1), f32),
        grid_spec=pltpu.PrefetchScalarGridSpec(
            num_scalar_prefetch=0,
            grid=(2, num_tiles),
            in_specs=[
                pl.BlockSpec((tile_n, d0), out_map),      # output (prediction)
                pl.BlockSpec((tile_n, d0), row_tile),     # target
                pl.BlockSpec((d0, d1_p), pinned),         # w1t
                pl.BlockSpec((1, d1_p), pinned),          # b1
                pl.BlockSpec((1, d1_p), pinned),          # gamma
                pl.BlockSpec((1, d1_p), pinned),          # beta
                pl.BlockSpec((d1_p, d2_p), pinned),       # w2t
                pl.BlockSpec((1, d2_p), pinned),          # b2
            ],
            out_specs=pl.BlockSpec((1, 1), pinned),
            scratch_shapes=[
                pltpu.VMEM((1, 1), f32),       # mse_acc
                pltpu.VMEM((1, d1_p), f32),    # bn_sum
                pltpu.VMEM((1, d1_p), f32),    # bn_sumsq
                pltpu.VMEM((1, 1), f32),       # orth_acc
            ],
        ),
        compiler_params=pltpu.CompilerParams(
            # Both axes carry accumulator state (BN couples phase 1 to all of
            # phase 0), so they must stay sequential.
            dimension_semantics=("arbitrary", "arbitrary"),
            # Sized for v7x (64 MiB physical): double-buffered row tiles +
            # resident weights + scratch stay well under 32 MiB at TILE_N=256.
            vmem_limit_bytes=32 * 1024 * 1024,
        ),
    )(output, target, prep["w1t"], prep["b1"], prep["gamma"], prep["beta"],
      prep["w2t"], prep["b2"])
    return loss[0, 0]


# ----------------------------- params & reference ---------------------------- #

def init_enc_params(key, hidden_dim):
    d0, d1, d2 = hidden_dim
    ks = jax.random.split(key, 4)
    f = lambda k, shape: (0.1 * jax.random.normal(k, shape)).astype(jnp.float32)
    # PyTorch Linear layout: weight is (out_features, in_features).
    return {
        "w1": f(ks[0], (d1, d0)), "b1": f(ks[1], (d1,)),
        "gamma": jnp.ones((d1,), jnp.float32), "beta": jnp.zeros((d1,), jnp.float32),
        "w2": f(ks[2], (d2, d1)), "b2": f(ks[3], (d2,)),
    }


def ortho_loss_reference(output, target, p, alpha):
    repr_loss = jnp.mean((output - target) ** 2)
    h1 = jnp.tanh(target @ p["w1"].T + p["b1"])
    mean = jnp.mean(h1, axis=0, keepdims=True)
    var = jnp.mean((h1 - mean) ** 2, axis=0, keepdims=True)
    hn = (h1 - mean) / jnp.sqrt(var + 1e-5) * p["gamma"] + p["beta"]
    f = jnp.tanh(hn @ p["w2"].T + p["b2"])
    orth = jnp.mean(jnp.sum(f * f, axis=-1) - 1.0)
    return repr_loss + alpha * orth
    # TODO(synk): trainHist['loss_repr'/'loss_orth'].append(...) is a host-side
    # Python side effect with no Pallas equivalent; not implemented.


# ----------------------------- main ------------------------------------------ #

if __name__ == "__main__":
    hidden_dim = [32, 16, 8]     # small stand-in for the default [500, 200, 100]
    N = 40                       # rows (the BatchNorm1d "batch"); not a tile multiple
    TILE_N = 16                  # small tile to exercise multi-tile grid + row masking
    ALPHA = 0.5

    key = jax.random.PRNGKey(0)
    k_out, k_tgt, k_par = jax.random.split(key, 3)
    target = jax.random.normal(k_tgt, (N, hidden_dim[0]), dtype=jnp.float32)
    output = target + 0.1 * jax.random.normal(k_out, (N, hidden_dim[0]),
                                              dtype=jnp.float32)
    enc_params = init_enc_params(k_par, hidden_dim)

    ref = ortho_loss_reference(output, target, enc_params, ALPHA)

    # f32 MXU-operand path (tight tolerance).
    prep_f32 = prepare_enc_params(enc_params, matmul_dtype=jnp.float32)
    loss_f32 = jax.block_until_ready(
        ortho_loss_forward(output, target, prep_f32, alpha=ALPHA, tile_n=TILE_N))
    assert loss_f32.shape == ()
    assert jnp.allclose(loss_f32, ref, atol=1e-3, rtol=1e-3), (loss_f32, ref)

    # bf16 MXU-operand path (default for v6e/v7x; f32 accumulation). bf16 operand
    # quantization moves the loss by O(1e-2), so the tolerance is looser.
    prep_bf16 = prepare_enc_params(enc_params)      # bf16 default
    loss_bf16 = jax.block_until_ready(
        ortho_loss_forward(output, target, prep_bf16, alpha=ALPHA, tile_n=TILE_N))
    assert loss_bf16.shape == ()
    assert jnp.allclose(loss_bf16, ref, atol=5e-2, rtol=5e-2), (loss_bf16, ref)

    print("KERNEL_OK")
</pallas_src>

<mosaic_0001>
module attributes {stable_mosaic.version = 11 : i64} {
  func.func @_ortho_loss_kernel(%arg0: i32, %arg1: i32, %arg2: memref<16x32xf32, #tpu.memory_space<vmem>>, %arg3: memref<16x32xf32, #tpu.memory_space<vmem>>, %arg4: memref<32x128xf32, #tpu.memory_space<vmem>>, %arg5: memref<1x128xf32, #tpu.memory_space<vmem>>, %arg6: memref<1x128xf32, #tpu.memory_space<vmem>>, %arg7: memref<1x128xf32, #tpu.memory_space<vmem>>, %arg8: memref<128x128xf32, #tpu.memory_space<vmem>>, %arg9: memref<1x128xf32, #tpu.memory_space<vmem>>, %arg10: memref<1x1xf32, #tpu.memory_space<vmem>>, %arg11: memref<1x1xf32, #tpu.memory_space<vmem>>, %arg12: memref<1x128xf32, #tpu.memory_space<vmem>>, %arg13: memref<1x128xf32, #tpu.memory_space<vmem>>, %arg14: memref<1x1xf32, #tpu.memory_space<vmem>>) attributes {dimension_semantics = [#tpu.dimension_semantics<arbitrary>, #tpu.dimension_semantics<arbitrary>], iteration_bounds = array<i64: 2, 3>, scalar_prefetch = 0 : i64, scratch_operands = 4 : i64, tpu.core_type = #tpu.core_type<tc>, window_params = [{transform_indices = @transform_0, window_bounds = array<i64: 16, 32>}, {transform_indices = @transform_1, window_bounds = array<i64: 16, 32>}, {pipeline_mode = #tpu.pipeline_mode<synchronous>, transform_indices = @transform_2, window_bounds = array<i64: 32, 128>}, {pipeline_mode = #tpu.pipeline_mode<synchronous>, transform_indices = @transform_3, window_bounds = array<i64: 1, 128>}, {pipeline_mode = #tpu.pipeline_mode<synchronous>, transform_indices = @transform_4, window_bounds = array<i64: 1, 128>}, {pipeline_mode = #tpu.pipeline_mode<synchronous>, transform_indices = @transform_5, window_bounds = array<i64: 1, 128>}, {pipeline_mode = #tpu.pipeline_mode<synchronous>, transform_indices = @transform_6, window_bounds = array<i64: 128, 128>}, {pipeline_mode = #tpu.pipeline_mode<synchronous>, transform_indices = @transform_7, window_bounds = array<i64: 1, 128>}, {pipeline_mode = #tpu.pipeline_mode<synchronous>, transform_indices = @transform_8, window_bounds = array<i64: 1, 1>}]} {
    %c0_i32 = arith.constant 0 : i32
    %0 = arith.cmpi eq, %arg0, %c0_i32 : i32
    %c0_i32_0 = arith.constant 0 : i32
    %1 = arith.cmpi eq, %arg1, %c0_i32_0 : i32
    %2 = arith.andi %0, %1 : i1
    %3 = arith.extui %2 : i1 to i32
    %c0_i32_1 = arith.constant 0 : i32
    %4 = arith.cmpi ne, %3, %c0_i32_1 : i32
    scf.if %4 {
      %cst_11 = arith.constant 0.000000e+00 : f32
      %28 = vector.broadcast %cst_11 : f32 to vector<1x1xf32>
      %c0_12 = arith.constant 0 : index
      %c0_13 = arith.constant 0 : index
      %29 = vector.load %arg11[%c0_12, %c0_13] : memref<1x1xf32, #tpu.memory_space<vmem>>, vector<1x1xf32>
      tpu.vector_store %arg11[%c0_12, %c0_13], %28 {strides = array<i32>} : memref<1x1xf32, #tpu.memory_space<vmem>>, vector<1x1xf32>,
      %cst_14 = arith.constant 0.000000e+00 : f32
      %30 = vector.broadcast %cst_14 : f32 to vector<1x1xf32>
      %c0_15 = arith.constant 0 : index
      %c0_16 = arith.constant 0 : index
      %31 = vector.load %arg14[%c0_15, %c0_16] : memref<1x1xf32, #tpu.memory_space<vmem>>, vector<1x1xf32>
      tpu.vector_store %arg14[%c0_15, %c0_16], %30 {strides = array<i32>} : memref<1x1xf32, #tpu.memory_space<vmem>>, vector<1x1xf32>,
      %cst_17 = arith.constant 0.000000e+00 : f32
      %32 = vector.broadcast %cst_17 : f32 to vector<1x128xf32>
      %c0_18 = arith.constant 0 : index
      %c0_19 = arith.constant 0 : index
      %33 = vector.load %arg12[%c0_18, %c0_19] : memref<1x128xf32, #tpu.memory_space<vmem>>, vector<1x128xf32>
      tpu.vector_store %arg12[%c0_18, %c0_19], %32 {strides = array<i32>} : memref<1x128xf32, #tpu.memory_space<vmem>>, vector<1x128xf32>,
      %cst_20 = arith.constant 0.000000e+00 : f32
      %34 = vector.broadcast %cst_20 : f32 to vector<1x128xf32>
      %c0_21 = arith.constant 0 : index
      %c0_22 = arith.constant 0 : index
      %35 = vector.load %arg13[%c0_21, %c0_22] : memref<1x128xf32, #tpu.memory_space<vmem>>, vector<1x128xf32>
      tpu.vector_store %arg13[%c0_21, %c0_22], %34 {strides = array<i32>} : memref<1x128xf32, #tpu.memory_space<vmem>>, vector<1x128xf32>,
    } else {
    }
    %c0 = arith.constant 0 : index
    %c0_2 = arith.constant 0 : index
    %5 = vector.load %arg3[%c0, %c0_2] : memref<16x32xf32, #tpu.memory_space<vmem>>, vector<16x32xf32>
    %c16_i32 = arith.constant 16 : i32
    %6 = arith.muli %arg1, %c16_i32 : i32
    %7 = tpu.iota {dimensions = array<i32: 0>} : vector<16x1xi32>
    %8 = vector.broadcast %6 : i32 to vector<16x1xi32>
    %9 = arith.addi %8, %7 : vector<16x1xi32>
    %c40_i32 = arith.constant 40 : i32
    %10 = vector.broadcast %c40_i32 : i32 to vector<16x1xi32>
    %11 = arith.cmpi slt, %9, %10 : vector<16x1xi32>
    %c0_3 = arith.constant 0 : index
    %c0_4 = arith.constant 0 : index
    %12 = vector.load %arg4[%c0_3, %c0_4] : memref<32x128xf32, #tpu.memory_space<vmem>>, vector<32x128xf32>
    %cst = arith.constant dense<0.000000e+00> : vector<16x128xf32>
    %13 = tpu.matmul %5, %12, %cst {dimension_numbers = #tpu.dot_dimension_numbers<[1], [0], [0], [1], [0, 0, 1, 1], [], []>} : vector<16x32xf32>, vector<32x128xf32>, vector<16x128xf32> -> vector<16x128xf32>
    %c0_5 = arith.constant 0 : index
    %c0_6 = arith.constant 0 : index
    %14 = vector.load %arg5[%c0_5, %c0_6] : memref<1x128xf32, #tpu.memory_space<vmem>>, vector<1x128xf32>
    %15 = vector.broadcast %14 : vector<1x128xf32> to vector<16x128xf32>
    %16 = arith.addf %13, %15 : vector<16x128xf32>
    %17 = math.tanh %16 : vector<16x128xf32>
    %cst_7 = arith.constant 0.000000e+00 : f32
    %18 = vector.shape_cast %11 : vector<16x1xi1> to vector<16x1xi1>
    %19 = vector.broadcast %18 : vector<16x1xi1> to vector<16x128xi1>
    %20 = vector.broadcast %cst_7 : f32 to vector<16x128xf32>
    %21 = arith.select %19, %17, %20 : vector<16x128xi1>, vector<16x128xf32>
    %c0_i32_8 = arith.constant 0 : i32
    %22 = arith.cmpi eq, %arg0, %c0_i32_8 : i32
    %23 = arith.extui %22 : i1 to i32
    %c0_i32_9 = arith.constant 0 : i32
    %24 = arith.cmpi ne, %23, %c0_i32_9 : i32
    scf.if %24 {
      %c0_11 = arith.constant 0 : index
      %c0_12 = arith.constant 0 : index
      %28 = vector.load %arg2[%c0_11, %c0_12] : memref<16x32xf32, #tpu.memory_space<vmem>>, vector<16x32xf32>
      %29 = arith.subf %28, %5 : vector<16x32xf32>
      %cst_13 = arith.constant 0.000000e+00 : f32
      %30 = vector.shape_cast %11 : vector<16x1xi1> to vector<16x1xi1>
      %31 = vector.broadcast %30 : vector<16x1xi1> to vector<16x32xi1>
      %32 = vector.broadcast %cst_13 : f32 to vector<16x32xf32>
      %33 = arith.select %31, %29, %32 : vector<16x32xi1>, vector<16x32xf32>
      %c0_14 = arith.constant 0 : index
      %c0_15 = arith.constant 0 : index
      %34 = vector.load %arg11[%c0_14, %c0_15] : memref<1x1xf32, #tpu.memory_space<vmem>>, vector<1x1xf32>
      %35 = arith.mulf %33, %33 : vector<16x32xf32>
      %36 = vector.shape_cast %35 : vector<16x32xf32> to vector<1x16x32xf32>
      %cst_16 = arith.constant dense<0.000000e+00> : vector<1xf32>
      %37 = vector.multi_reduction <add>, %36, %cst_16 [1, 2] : vector<1x16x32xf32> to vector<1xf32>
      %38 = vector.shape_cast %37 : vector<1xf32> to vector<1x1x1xf32>
      %39 = vector.extract %38[0, 0, 0] : f32 from vector<1x1x1xf32>
      %40 = vector.broadcast %39 : f32 to vector<1x1xf32>
      %41 = arith.addf %34, %40 : vector<1x1xf32>
      %c0_17 = arith.constant 0 : index
      %c0_18 = arith.constant 0 : index
      %42 = vector.load %arg11[%c0_17, %c0_18] : memref<1x1xf32, #tpu.memory_space<vmem>>, vector<1x1xf32>
      tpu.vector_store %arg11[%c0_17, %c0_18], %41 {strides = array<i32>} : memref<1x1xf32, #tpu.memory_space<vmem>>, vector<1x1xf32>,
      %cst_19 = arith.constant 1.000000e+00 : f32
      %43 = vector.broadcast %cst_19 : f32 to vector<1x16xf32>
      %c0_20 = arith.constant 0 : index
      %c0_21 = arith.constant 0 : index
      %44 = vector.load %arg12[%c0_20, %c0_21] : memref<1x128xf32, #tpu.memory_space<vmem>>, vector<1x128xf32>
      %cst_22 = arith.constant dense<0.000000e+00> : vector<1x128xf32>
      %45 = tpu.matmul %43, %21, %cst_22 {dimension_numbers = #tpu.dot_dimension_numbers<[1], [0], [0], [1], [0, 0, 1, 1], [], []>} : vector<1x16xf32>, vector<16x128xf32>, vector<1x128xf32> -> vector<1x128xf32>
      %46 = arith.addf %44, %45 : vector<1x128xf32>
      %c0_23 = arith.constant 0 : index
      %c0_24 = arith.constant 0 : index
      %47 = vector.load %arg12[%c0_23, %c0_24] : memref<1x128xf32, #tpu.memory_space<vmem>>, vector<1x128xf32>
      tpu.vector_store %arg12[%c0_23, %c0_24], %46 {strides = array<i32>} : memref<1x128xf32, #tpu.memory_space<vmem>>, vector<1x128xf32>,
      %c0_25 = arith.constant 0 : index
      %c0_26 = arith.constant 0 : index
      %48 = vector.load %arg13[%c0_25, %c0_26] : memref<1x128xf32, #tpu.memory_space<vmem>>, vector<1x128xf32>
      %49 = arith.mulf %21, %21 : vector<16x128xf32>
      %cst_27 = arith.constant dense<0.000000e+00> : vector<1x128xf32>
      %50 = tpu.matmul %43, %49, %cst_27 {dimension_numbers = #tpu.dot_dimension_numbers<[1], [0], [0], [1], [0, 0, 1, 1], [], []>} : vector<1x16xf32>, vector<16x128xf32>, vector<1x128xf32> -> vector<1x128xf32>
      %51 = arith.addf %48, %50 : vector<1x128xf32>
      %c0_28 = arith.constant 0 : index
      %c0_29 = arith.constant 0 : index
      %52 = vector.load %arg13[%c0_28, %c0_29] : memref<1x128xf32, #tpu.memory_space<vmem>>, vector<1x128xf32>
      tpu.vector_store %arg13[%c0_28, %c0_29], %51 {strides = array<i32>} : memref<1x128xf32, #tpu.memory_space<vmem>>, vector<1x128xf32>,
    } else {
    }
    %c1_i32 = arith.constant 1 : i32
    %25 = arith.cmpi eq, %arg0, %c1_i32 : i32
    %26 = arith.extui %25 : i1 to i32
    %c0_i32_10 = arith.constant 0 : i32
    %27 = arith.cmpi ne, %26, %c0_i32_10 : i32
    scf.if %27 {
      %c0_11 = arith.constant 0 : index
      %c0_12 = arith.constant 0 : index
      %28 = vector.load %arg12[%c0_11, %c0_12] : memref<1x128xf32, #tpu.memory_space<vmem>>, vector<1x128xf32>
      %cst_13 = arith.constant 2.500000e-02 : f32
      %29 = vector.broadcast %cst_13 : f32 to vector<1x128xf32>
      %30 = arith.mulf %28, %29 : vector<1x128xf32>
      %c0_14 = arith.constant 0 : index
      %c0_15 = arith.constant 0 : index
      %31 = vector.load %arg13[%c0_14, %c0_15] : memref<1x128xf32, #tpu.memory_space<vmem>>, vector<1x128xf32>
      %cst_16 = arith.constant 2.500000e-02 : f32
      %32 = vector.broadcast %cst_16 : f32 to vector<1x128xf32>
      %33 = arith.mulf %31, %32 : vector<1x128xf32>
      %34 = arith.mulf %30, %30 : vector<1x128xf32>
      %35 = arith.subf %33, %34 : vector<1x128xf32>
      %cst_17 = arith.constant 0.000000e+00 : f32
      %36 = vector.broadcast %cst_17 : f32 to vector<1x128xf32>
      %37 = arith.maximumf %35, %36 : vector<1x128xf32>
      %38 = vector.broadcast %30 : vector<1x128xf32> to vector<16x128xf32>
      %39 = arith.subf %21, %38 : vector<16x128xf32>
      %cst_18 = arith.constant 9.99999974E-6 : f32
      %40 = vector.broadcast %cst_18 : f32 to vector<1x128xf32>
      %41 = arith.addf %37, %40 : vector<1x128xf32>
      %42 = math.rsqrt %41 : vector<1x128xf32>
      %43 = vector.broadcast %42 : vector<1x128xf32> to vector<16x128xf32>
      %44 = arith.mulf %39, %43 : vector<16x128xf32>
      %c0_19 = arith.constant 0 : index
      %c0_20 = arith.constant 0 : index
      %45 = vector.load %arg6[%c0_19, %c0_20] : memref<1x128xf32, #tpu.memory_space<vmem>>, vector<1x128xf32>
      %46 = vector.broadcast %45 : vector<1x128xf32> to vector<16x128xf32>
      %47 = arith.mulf %44, %46 : vector<16x128xf32>
      %c0_21 = arith.constant 0 : index
      %c0_22 = arith.constant 0 : index
      %48 = vector.load %arg7[%c0_21, %c0_22] : memref<1x128xf32, #tpu.memory_space<vmem>>, vector<1x128xf32>
      %49 = vector.broadcast %48 : vector<1x128xf32> to vector<16x128xf32>
      %50 = arith.addf %47, %49 : vector<16x128xf32>
      %c0_23 = arith.constant 0 : index
      %c0_24 = arith.constant 0 : index
      %51 = vector.load %arg8[%c0_23, %c0_24] : memref<128x128xf32, #tpu.memory_space<vmem>>, vector<128x128xf32>
      %cst_25 = arith.constant dense<0.000000e+00> : vector<16x128xf32>
      %52 = tpu.matmul %50, %51, %cst_25 {dimension_numbers = #tpu.dot_dimension_numbers<[1], [0], [0], [1], [0, 0, 1, 1], [], []>} : vector<16x128xf32>, vector<128x128xf32>, vector<16x128xf32> -> vector<16x128xf32>
      %c0_26 = arith.constant 0 : index
      %c0_27 = arith.constant 0 : index
      %53 = vector.load %arg9[%c0_26, %c0_27] : memref<1x128xf32, #tpu.memory_space<vmem>>, vector<1x128xf32>
      %54 = vector.broadcast %53 : vector<1x128xf32> to vector<16x128xf32>
      %55 = arith.addf %52, %54 : vector<16x128xf32>
      %56 = math.tanh %55 : vector<16x128xf32>
      %57 = arith.mulf %56, %56 : vector<16x128xf32>
      %cst_28 = arith.constant dense<0.000000e+00> : vector<16xf32>
      %58 = vector.multi_reduction <add>, %57, %cst_28 [1] : vector<16x128xf32> to vector<16xf32>
      %59 = vector.shape_cast %58 : vector<16xf32> to vector<16x1xf32>
      %cst_29 = arith.constant 0.000000e+00 : f32
      %60 = vector.broadcast %cst_29 : f32 to vector<16x1xf32>
      %61 = arith.select %11, %59, %60 : vector<16x1xi1>, vector<16x1xf32>
      %c0_30 = arith.constant 0 : index
      %c0_31 = arith.constant 0 : index
      %62 = vector.load %arg14[%c0_30, %c0_31] : memref<1x1xf32, #tpu.memory_space<vmem>>, vector<1x1xf32>
      %63 = vector.shape_cast %61 : vector<16x1xf32> to vector<1x16x1xf32>
      %cst_32 = arith.constant dense<0.000000e+00> : vector<1xf32>
      %64 = vector.multi_reduction <add>, %63, %cst_32 [1, 2] : vector<1x16x1xf32> to vector<1xf32>
      %65 = vector.shape_cast %64 : vector<1xf32> to vector<1x1x1xf32>
      %66 = vector.extract %65[0, 0, 0] : f32 from vector<1x1x1xf32>
      %67 = vector.broadcast %66 : f32 to vector<1x1xf32>
      %68 = arith.addf %62, %67 : vector<1x1xf32>
      %c0_33 = arith.constant 0 : index
      %c0_34 = arith.constant 0 : index
      %69 = vector.load %arg14[%c0_33, %c0_34] : memref<1x1xf32, #tpu.memory_space<vmem>>, vector<1x1xf32>
      tpu.vector_store %arg14[%c0_33, %c0_34], %68 {strides = array<i32>} : memref<1x1xf32, #tpu.memory_space<vmem>>, vector<1x1xf32>,
      %c2_i32 = arith.constant 2 : i32
      %70 = arith.cmpi eq, %arg1, %c2_i32 : i32
      %71 = arith.extui %70 : i1 to i32
      %c0_i32_35 = arith.constant 0 : i32
      %72 = arith.cmpi ne, %71, %c0_i32_35 : i32
      scf.if %72 {
        %c0_36 = arith.constant 0 : index
        %c0_37 = arith.constant 0 : index
        %73 = vector.load %arg11[%c0_36, %c0_37] : memref<1x1xf32, #tpu.memory_space<vmem>>, vector<1x1xf32>
        %cst_38 = arith.constant 7.812500e-04 : f32
        %74 = vector.broadcast %cst_38 : f32 to vector<1x1xf32>
        %75 = arith.mulf %73, %74 : vector<1x1xf32>
        %c0_39 = arith.constant 0 : index
        %c0_40 = arith.constant 0 : index
        %76 = vector.load %arg14[%c0_39, %c0_40] : memref<1x1xf32, #tpu.memory_space<vmem>>, vector<1x1xf32>
        %cst_41 = arith.constant 2.500000e-02 : f32
        %77 = vector.broadcast %cst_41 : f32 to vector<1x1xf32>
        %78 = arith.mulf %76, %77 : vector<1x1xf32>
        %cst_42 = arith.constant 1.000000e+00 : f32
        %79 = vector.broadcast %cst_42 : f32 to vector<1x1xf32>
        %80 = arith.subf %78, %79 : vector<1x1xf32>
        %cst_43 = arith.constant 5.000000e-01 : f32
        %81 = vector.broadcast %cst_43 : f32 to vector<1x1xf32>
        %82 = arith.mulf %81, %80 : vector<1x1xf32>
        %83 = arith.addf %75, %82 : vector<1x1xf32>
        %c0_44 = arith.constant 0 : index
        %c0_45 = arith.constant 0 : index
        %84 = vector.load %arg10[%c0_44, %c0_45] : memref<1x1xf32, #tpu.memory_space<vmem>>, vector<1x1xf32>
        tpu.vector_store %arg10[%c0_44, %c0_45], %83 {strides = array<i32>} : memref<1x1xf32, #tpu.memory_space<vmem>>, vector<1x1xf32>,
      } else {
      }
    } else {
    }
    return
  }
  func.func @transform_0(%arg0: i32, %arg1: i32) -> (i32, i32) {
    %c1_i32 = arith.constant 1 : i32
    %0 = arith.subi %c1_i32, %arg0 : i32
    %1 = arith.muli %arg1, %0 : i32
    %c0_i32 = arith.constant 0 : i32
    %c0_i32_0 = arith.constant 0 : i32
    return %1, %c0_i32 : i32, i32
  }
  func.func @transform_1(%arg0: i32, %arg1: i32) -> (i32, i32) {
    %c0_i32 = arith.constant 0 : i32
    %c0_i32_0 = arith.constant 0 : i32
    return %arg1, %c0_i32 : i32, i32
  }
  func.func @transform_2(%arg0: i32, %arg1: i32) -> (i32, i32) {
    %c0_i32 = arith.constant 0 : i32
    %c0_i32_0 = arith.constant 0 : i32
    %c0_i32_1 = arith.constant 0 : i32
    return %c0_i32, %c0_i32_0 : i32, i32
  }
  func.func @transform_3(%arg0: i32, %arg1: i32) -> (i32, i32) {
    %c0_i32 = arith.constant 0 : i32
    %c0_i32_0 = arith.constant 0 : i32
    %c0_i32_1 = arith.constant 0 : i32
    return %c0_i32, %c0_i32_0 : i32, i32
  }
  func.func @transform_4(%arg0: i32, %arg1: i32) -> (i32, i32) {
    %c0_i32 = arith.constant 0 : i32
    %c0_i32_0 = arith.constant 0 : i32
    %c0_i32_1 = arith.constant 0 : i32
    return %c0_i32, %c0_i32_0 : i32, i32
  }
  func.func @transform_5(%arg0: i32, %arg1: i32) -> (i32, i32) {
    %c0_i32 = arith.constant 0 : i32
    %c0_i32_0 = arith.constant 0 : i32
    %c0_i32_1 = arith.constant 0 : i32
    return %c0_i32, %c0_i32_0 : i32, i32
  }
  func.func @transform_6(%arg0: i32, %arg1: i32) -> (i32, i32) {
    %c0_i32 = arith.constant 0 : i32
    %c0_i32_0 = arith.constant 0 : i32
    %c0_i32_1 = arith.constant 0 : i32
    return %c0_i32, %c0_i32_0 : i32, i32
  }
  func.func @transform_7(%arg0: i32, %arg1: i32) -> (i32, i32) {
    %c0_i32 = arith.constant 0 : i32
    %c0_i32_0 = arith.constant 0 : i32
    %c0_i32_1 = arith.constant 0 : i32
    return %c0_i32, %c0_i32_0 : i32, i32
  }
  func.func @transform_8(%arg0: i32, %arg1: i32) -> (i32, i32) {
    %c0_i32 = arith.constant 0 : i32
    %c0_i32_0 = arith.constant 0 : i32
    %c0_i32_1 = arith.constant 0 : i32
    return %c0_i32, %c0_i32_0 : i32, i32
  }
}

</mosaic_0001>

<llo_original>
// kernel: ortho_loss_forward.1
$region0: #{ortho_loss_forward.1}
  #allocation0 [shape = 'u32[]', space=smem, size = 0x4, offset = 0x4, fixed_abs, tag = 'smem constant byte address 0x4 - core index']
  #allocation1 [shape = 'u32[144,128]{1,0:T(1,128)}', space=vmem, size = 0x12000, scoped, tag = 'internal scratch']
  #allocation2 [shape = 'f32[1,1]{1,0:T(1,128)}', space=vmem, size = 0x200, scoped, tag = 'scratch operand']
  #allocation3 [shape = 'f32[1,128]{1,0:T(1,128)}', space=vmem, size = 0x200, scoped, tag = 'scratch operand']
  #allocation4 [shape = 'f32[1,128]{1,0:T(1,128)}', space=vmem, size = 0x200, scoped, tag = 'scratch operand']
  #allocation5 [shape = 'f32[1,1]{1,0:T(1,128)}', space=vmem, size = 0x200, scoped, tag = 'scratch operand']
  %s0 = inlined_call_operand.vmem [shape: f32[40,32], index: 0, kind: input, shape index: {}]
  %s1 = inlined_call_operand.vmem [shape: f32[40,32], index: 1, kind: input, shape index: {}]
  %s2 = inlined_call_operand.hbm [shape: f32[32,128], index: 2, kind: input, shape index: {}]
  %s3 = inlined_call_operand.vmem [shape: f32[1,128], index: 3, kind: input, shape index: {}]
  %s4 = inlined_call_operand.vmem [shape: f32[1,128], index: 4, kind: input, shape index: {}]
  %s5 = inlined_call_operand.vmem [shape: f32[1,128], index: 5, kind: input, shape index: {}]
  %s6 = inlined_call_operand.vmem [shape: f32[128,128], index: 6, kind: input, shape index: {}]
  %s7 = inlined_call_operand.vmem [shape: f32[1,128], index: 7, kind: input, shape index: {}]
  %s8 = inlined_call_operand.hbm [shape: f32[1,1], index: 8, kind: output, shape index: {}]
  %s9 = sld [smem:[#allocation0]]
  $region85: #{ortho_loss_forward.1} parent=0
    _
  %s11 = ssub.s32 1, %s9
  %s12 = scalar_select 0, %s11, %s9
  $region1: #{ortho_loss_forward.1} parent=0
    #allocation6 [shape = 'u8[16384]{0}', space=vmem, size = 0x4000, scoped, tag = 'input window, operand 2, single buffered']
    #allocation7 [shape = 's32[2]{0}', space=sflag, size = 0x8, scoped, tag = 'scoped memory for ortho_loss_forward.1']
    #allocation8 [shape = 's32[2]{0}', space=sflag, size = 0x8, scoped, tag = 'scoped memory for ortho_loss_forward.1']
    #allocation9 [shape = 'u8[512]{0}', space=vmem, size = 0x400, scoped, tag = 'output window, operand 0, single buffered']
    %13 = vsyncpa [#allocation7], 0
    %14 = vsyncpa [#allocation8], 0
    loop: start=0, step=1, limit=8
    $region2: #{ortho_loss_forward.1} parent=1 // loop_pre_header
      _
    $region3: #{ortho_loss_forward.1} parent=1 // loop_header
      %s16 = sphi 0, %s20
      %p17 = scmp.ge.s32.totalorder %s16, 8
      %s23 = sphi 0, %s35
      %s24 = sphi 0, %s31
      %s25 = sphi 0, %s23
      %s26 = sphi 0, %s24
      %s27 = sphi 0, %s25
      %s28 = sphi 0, %s26
      %s42 = sphi 0, %s44
      %s45 = sphi 0, %s42
      %s46 = sphi 0, %s45
      %s62 = sphi 0, %s46
      %s68 = sphi 0, %s70
      %s71 = sphi 0, %s68
      %s72 = sphi 0, %s71
      %s88 = sphi 0, %s72
      %s92 = sphi 0, %s92
      %s94 = sphi 0, %s92
      %s95 = sphi 0, %s94
      %s109 = sphi 0, %s95
      %s113 = sphi 0, %s113
      %s115 = sphi 0, %s113
      %s116 = sphi 0, %s115
      %s130 = sphi 0, %s116
      %s134 = sphi 0, %s134
      %s136 = sphi 0, %s134
      %s137 = sphi 0, %s136
      %s151 = sphi 0, %s137
      %s155 = sphi 0, %s155
      %s157 = sphi 0, %s155
      %s158 = sphi 0, %s157
      %s172 = sphi 0, %s158
      %s176 = sphi 0, %s176
      %s178 = sphi 0, %s176
      %s179 = sphi 0, %s178
      %s193 = sphi 0, %s179
      %s197 = sphi 0, %s197
      %s199 = sphi 0, %s197
      %s200 = sphi 0, %s199
      %s214 = sphi 0, %s200
      %s218 = sphi 0, %s218
      %s220 = sphi 0, %s218
      %s221 = sphi 0, %s220
      %s235 = sphi 0, %s221
    $region4: #{ortho_loss_forward.1} parent=1 // loop_header_branch
      %19 = sbr.rel (%p17) target = $region8
    $region5: #{ortho_loss_forward.1} parent=1 // loop_body
      %s21 = ssub.s32 %s16, 1
      %s22 = ssub.s32 %s16, 2
      %s29 = sadd.s32 1, %s24
      %p30 = scmp.ge.s32.totalorder %s29, 3
      %s31 = scalar_select %p30, 0, %s29
      %s32 = sadd.s32 1, %s23
      %s33 = scalar_select %p30, %s32, %s23
      %p34 = scmp.ge.s32.totalorder %s33, 2
      %s35 = scalar_select %p34, 0, %s33
      %s36 = ssub.s32 1, %s23
      %s37 = smul.u32 %s24, %s36
      %s38 = ssub.s32 1, %s35
      %s39 = smul.u32 %s31, %s38
      %s40 = ssub.s32 %s37, %s39
      %p41 = scmp.eq.s32.totalorder %s40, 0
      %s43 = sadd.s32 %s42, 1
      %s44 = scalar_select %p41, %s42, %s43
      %p47 = pneg %p41
      %p48 = scmp.eq.s32.totalorder %s16, 5
      %p49 = por %p47, %p48
      %p50 = scmp.ne.s32.totalorder %s42, %s45
      %p51 = scmp.eq.s32.totalorder %s16, 0
      %p52 = por %p50, %p51
      %p53 = scmp.ne.s32.totalorder %s42, %s45
      %p54 = scmp.eq.s32.totalorder %s21, 5
      %p55 = por %p53, %p54
      %p56 = scmp.ne.s32.totalorder %s45, %s46
      %p57 = scmp.eq.s32.totalorder %s21, 0
      %p58 = por %p56, %p57
      %p59 = scmp.ne.s32.totalorder %s45, %s46
      %p60 = scmp.eq.s32.totalorder %s22, 5
      %p61 = por %p59, %p60
      %p63 = scmp.ne.s32.totalorder %s46, %s62
      %p64 = scmp.eq.s32.totalorder %s22, 0
      %p65 = por %p63, %p64
      %s66 = ssub.s32 %s24, %s31
      %p67 = scmp.eq.s32.totalorder %s66, 0
      %s69 = sadd.s32 %s68, 1
      %s70 = scalar_select %p67, %s68, %s69
      %p73 = pneg %p67
      %p74 = scmp.eq.s32.totalorder %s16, 5
      %p75 = por %p73, %p74
      %p76 = scmp.ne.s32.totalorder %s68, %s71
      %p77 = scmp.eq.s32.totalorder %s16, 0
      %p78 = por %p76, %p77
      %p79 = scmp.ne.s32.totalorder %s68, %s71
      %p80 = scmp.eq.s32.totalorder %s21, 5
      %p81 = por %p79, %p80
      %p82 = scmp.ne.s32.totalorder %s71, %s72
      %p83 = scmp.eq.s32.totalorder %s21, 0
      %p84 = por %p82, %p83
      %p85 = scmp.ne.s32.totalorder %s71, %s72
      %p86 = scmp.eq.s32.totalorder %s22, 5
      %p87 = por %p85, %p86
      %p89 = scmp.ne.s32.totalorder %s72, %s88
      %p90 = scmp.eq.s32.totalorder %s22, 0
      %p91 = por %p89, %p90
      %s93 = sadd.s32 %s92, 1
      %p96 = scmp.eq.s32.totalorder %s16, 5
      %p97 = scmp.ne.s32.totalorder %s92, %s94
      %p98 = scmp.eq.s32.totalorder %s16, 0
      %p99 = por %p97, %p98
      %p100 = scmp.ne.s32.totalorder %s92, %s94
      %p101 = scmp.eq.s32.totalorder %s21, 5
      %p102 = por %p100, %p101
      %p103 = scmp.ne.s32.totalorder %s94, %s95
      %p104 = scmp.eq.s32.totalorder %s21, 0
      %p105 = por %p103, %p104
      %p106 = scmp.ne.s32.totalorder %s94, %s95
      %p107 = scmp.eq.s32.totalorder %s22, 5
      %p108 = por %p106, %p107
      %p110 = scmp.ne.s32.totalorder %s95, %s109
      %p111 = scmp.eq.s32.totalorder %s22, 0
      %p112 = por %p110, %p111
      %s114 = sadd.s32 %s113, 1
      %p117 = scmp.eq.s32.totalorder %s16, 5
      %p118 = scmp.ne.s32.totalorder %s113, %s115
      %p119 = scmp.eq.s32.totalorder %s16, 0
      %p120 = por %p118, %p119
      %p121 = scmp.ne.s32.totalorder %s113, %s115
      %p122 = scmp.eq.s32.totalorder %s21, 5
      %p123 = por %p121, %p122
      %p124 = scmp.ne.s32.totalorder %s115, %s116
      %p125 = scmp.eq.s32.totalorder %s21, 0
      %p126 = por %p124, %p125
      %p127 = scmp.ne.s32.totalorder %s115, %s116
      %p128 = scmp.eq.s32.totalorder %s22, 5
      %p129 = por %p127, %p128
      %p131 = scmp.ne.s32.totalorder %s116, %s130
      %p132 = scmp.eq.s32.totalorder %s22, 0
      %p133 = por %p131, %p132
      %s135 = sadd.s32 %s134, 1
      %p138 = scmp.eq.s32.totalorder %s16, 5
      %p139 = scmp.ne.s32.totalorder %s134, %s136
      %p140 = scmp.eq.s32.totalorder %s16, 0
      %p141 = por %p139, %p140
      %p142 = scmp.ne.s32.totalorder %s134, %s136
      %p143 = scmp.eq.s32.totalorder %s21, 5
      %p144 = por %p142, %p143
      %p145 = scmp.ne.s32.totalorder %s136, %s137
      %p146 = scmp.eq.s32.totalorder %s21, 0
      %p147 = por %p145, %p146
      %p148 = scmp.ne.s32.totalorder %s136, %s137
      %p149 = scmp.eq.s32.totalorder %s22, 5
      %p150 = por %p148, %p149
      %p152 = scmp.ne.s32.totalorder %s137, %s151
      %p153 = scmp.eq.s32.totalorder %s22, 0
      %p154 = por %p152, %p153
      %s156 = sadd.s32 %s155, 1
      %p159 = scmp.eq.s32.totalorder %s16, 5
      %p160 = scmp.ne.s32.totalorder %s155, %s157
      %p161 = scmp.eq.s32.totalorder %s16, 0
      %p162 = por %p160, %p161
      %p163 = scmp.ne.s32.totalorder %s155, %s157
      %p164 = scmp.eq.s32.totalorder %s21, 5
      %p165 = por %p163, %p164
      %p166 = scmp.ne.s32.totalorder %s157, %s158
      %p167 = scmp.eq.s32.totalorder %s21, 0
      %p168 = por %p166, %p167
      %p169 = scmp.ne.s32.totalorder %s157, %s158
      %p170 = scmp.eq.s32.totalorder %s22, 5
      %p171 = por %p169, %p170
      %p173 = scmp.ne.s32.totalorder %s158, %s172
      %p174 = scmp.eq.s32.totalorder %s22, 0
      %p175 = por %p173, %p174
      %s177 = sadd.s32 %s176, 1
      %p180 = scmp.eq.s32.totalorder %s16, 5
      %p181 = scmp.ne.s32.totalorder %s176, %s178
      %p182 = scmp.eq.s32.totalorder %s16, 0
      %p183 = por %p181, %p182
      %p184 = scmp.ne.s32.totalorder %s176, %s178
      %p185 = scmp.eq.s32.totalorder %s21, 5
      %p186 = por %p184, %p185
      %p187 = scmp.ne.s32.totalorder %s178, %s179
      %p188 = scmp.eq.s32.totalorder %s21, 0
      %p189 = por %p187, %p188
      %p190 = scmp.ne.s32.totalorder %s178, %s179
      %p191 = scmp.eq.s32.totalorder %s22, 5
      %p192 = por %p190, %p191
      %p194 = scmp.ne.s32.totalorder %s179, %s193
      %p195 = scmp.eq.s32.totalorder %s22, 0
      %p196 = por %p194, %p195
      %s198 = sadd.s32 %s197, 1
      %p201 = scmp.eq.s32.totalorder %s16, 5
      %p202 = scmp.ne.s32.totalorder %s197, %s199
      %p203 = scmp.eq.s32.totalorder %s16, 0
      %p204 = por %p202, %p203
      %p205 = scmp.ne.s32.totalorder %s197, %s199
      %p206 = scmp.eq.s32.totalorder %s21, 5
      %p207 = por %p205, %p206
      %p208 = scmp.ne.s32.totalorder %s199, %s200
      %p209 = scmp.eq.s32.totalorder %s21, 0
      %p210 = por %p208, %p209
      %p211 = scmp.ne.s32.totalorder %s199, %s200
      %p212 = scmp.eq.s32.totalorder %s22, 5
      %p213 = por %p211, %p212
      %p215 = scmp.ne.s32.totalorder %s200, %s214
      %p216 = scmp.eq.s32.totalorder %s22, 0
      %p217 = por %p215, %p216
      %s219 = sadd.s32 %s218, 1
      %p222 = scmp.eq.s32.totalorder %s16, 5
      %p223 = scmp.ne.s32.totalorder %s218, %s220
      %p224 = scmp.eq.s32.totalorder %s16, 0
      %p225 = por %p223, %p224
      %p226 = scmp.ne.s32.totalorder %s218, %s220
      %p227 = scmp.eq.s32.totalorder %s21, 5
      %p228 = por %p226, %p227
      %p229 = scmp.ne.s32.totalorder %s220, %s221
      %p230 = scmp.eq.s32.totalorder %s21, 0
      %p231 = por %p229, %p230
      %p232 = scmp.ne.s32.totalorder %s220, %s221
      %p233 = scmp.eq.s32.totalorder %s22, 5
      %p234 = por %p232, %p233
      %p236 = scmp.ne.s32.totalorder %s221, %s235
      %p237 = scmp.eq.s32.totalorder %s22, 0
      %p238 = por %p236, %p237
      %p239 = scmp.le.s32.totalorder 1, %s16
      %p240 = scmp.lt.s32.totalorder %s16, 7
      %p241 = pnand %p239, %p240
      %p242 = pneg %p241
      // Predicated region
      $region9: #{ortho_loss_forward.1} parent=5 // pred_check
        _
      $region10: #{ortho_loss_forward.1} parent=5 // pred_check_branch
        %244 = sbr.rel (%p241) target = $region12
      $region11: #{ortho_loss_forward.1} parent=5 // pred_region
        %s245 = ssub.s32 %s16, 1
        // Predicated region
        $region13: #{ortho_loss_forward.1} parent=11 // pred_check
          %p246 = pneg %p105
        $region14: #{ortho_loss_forward.1} parent=11 // pred_check_branch
          %248 = sbr.rel (%p246) target = $region16
        $region15: #{ortho_loss_forward.1} parent=11 // pred_region
          %s250 = ssub.s32 512, 512
          %251 = vsyncadd [#allocation7], %s250
          %s252 = sshll.u32 [#allocation6], 4
          %s253 = int_to_ptr.vmem [resolvable:$true] %s252
          %258 = dma.hbm_to_vmem [thread:$0]  %s2, 512, %s253, [#allocation7], 128, 128, 8
        $region16: #{ortho_loss_forward.1} parent=11 // pred_fallthru
          _
        // Predicated region
        $region17: #{ortho_loss_forward.1} parent=11 // pred_check
          %p259 = pneg %p126
        $region18: #{ortho_loss_forward.1} parent=11 // pred_check_branch
          %261 = sbr.rel (%p259) target = $region20
        $region19: #{ortho_loss_forward.1} parent=11 // pred_region
          _
        $region20: #{ortho_loss_forward.1} parent=11 // pred_fallthru
          _
        // Predicated region
        $region21: #{ortho_loss_forward.1} parent=11 // pred_check
          %p262 = pneg %p147
        $region22: #{ortho_loss_forward.1} parent=11 // pred_check_branch
          %264 = sbr.rel (%p262) target = $region24
        $region23: #{ortho_loss_forward.1} parent=11 // pred_region
          _
        $region24: #{ortho_loss_forward.1} parent=11 // pred_fallthru
          _
        // Predicated region
        $region25: #{ortho_loss_forward.1} parent=11 // pred_check
          %p265 = pneg %p168
        $region26: #{ortho_loss_forward.1} parent=11 // pred_check_branch
          %267 = sbr.rel (%p265) target = $region28
        $region27: #{ortho_loss_forward.1} parent=11 // pred_region
          _
        $region28: #{ortho_loss_forward.1} parent=11 // pred_fallthru
          _
        // Predicated region
        $region29: #{ortho_loss_forward.1} parent=11 // pred_check
          %p268 = pneg %p189
        $region30: #{ortho_loss_forward.1} parent=11 // pred_check_branch
          %270 = sbr.rel (%p268) target = $region32
        $region31: #{ortho_loss_forward.1} parent=11 // pred_region
          _
        $region32: #{ortho_loss_forward.1} parent=11 // pred_fallthru
          _
        // Predicated region
        $region33: #{ortho_loss_forward.1} parent=11 // pred_check
          %p271 = pneg %p210
        $region34: #{ortho_loss_forward.1} parent=11 // pred_check_branch
          %273 = sbr.rel (%p271) target = $region36
        $region35: #{ortho_loss_forward.1} parent=11 // pred_region
          _
        $region36: #{ortho_loss_forward.1} parent=11 // pred_fallthru
          _
      $region12: #{ortho_loss_forward.1} parent=5 // pred_fallthru
        _
      %p274 = scmp.lt.s32.totalorder %s16, 6
      // Predicated region
      $region37: #{ortho_loss_forward.1} parent=5 // pred_check
        %p275 = pneg %p274
      $region38: #{ortho_loss_forward.1} parent=5 // pred_check_branch
        %277 = sbr.rel (%p275) target = $region40
      $region39: #{ortho_loss_forward.1} parent=5 // pred_region
        // Predicated region
        $region41: #{ortho_loss_forward.1} parent=39 // pred_check
          %p278 = pneg %p52
        $region42: #{ortho_loss_forward.1} parent=39 // pred_check_branch
          %280 = sbr.rel (%p278) target = $region44
        $region43: #{ortho_loss_forward.1} parent=39 // pred_region
          %s281 = ssub.s32 1, %s23
          %s282 = smul.u32 %s24, %s281
          %s283 = smul.u32 2, %s282
          %s284 = ssub.s32 5, %s283
          %p285 = scmp.lt.s32.totalorder %s284, 2
          %s286 = scalar_select %p285, %s284, 2
          %s287 = smul.u32 128, %s286
          %p288 = scmp.lt.s32.totalorder %s283, 4
          %s289 = scalar_select %p288, %s283, 4
          %s290 = smul.addr %s289, 8
          %s291 = scalar_lea.vmem %s0, %s290
          %s292 = ssub.s32 1, %s23
          %s293 = smul.u32 %s24, %s292
          %s294 = smul.u32 2, %s293
          %s295 = ssub.s32 5, %s294
          %p296 = scmp.lt.s32.totalorder %s295, 2
          %s297 = scalar_select %p296, %s295, 2
          %s298 = smul.u32 128, %s297
        $region44: #{ortho_loss_forward.1} parent=39 // pred_fallthru
          _
        // Predicated region
        $region45: #{ortho_loss_forward.1} parent=39 // pred_check
          %p299 = pneg %p78
        $region46: #{ortho_loss_forward.1} parent=39 // pred_check_branch
          %301 = sbr.rel (%p299) target = $region48
        $region47: #{ortho_loss_forward.1} parent=39 // pred_region
          %s302 = smul.u32 2, %s24
          %s303 = ssub.s32 5, %s302
          %p304 = scmp.lt.s32.totalorder %s303, 2
          %s305 = scalar_select %p304, %s303, 2
          %s306 = smul.u32 128, %s305
          %p307 = scmp.lt.s32.totalorder %s302, 4
          %s308 = scalar_select %p307, %s302, 4
          %s309 = smul.addr %s308, 8
          %s310 = scalar_lea.vmem %s1, %s309
          %s311 = smul.u32 2, %s24
          %s312 = ssub.s32 5, %s311
          %p313 = scmp.lt.s32.totalorder %s312, 2
          %s314 = scalar_select %p313, %s312, 2
          %s315 = smul.u32 128, %s314
        $region48: #{ortho_loss_forward.1} parent=39 // pred_fallthru
          _
      $region40: #{ortho_loss_forward.1} parent=5 // pred_fallthru
        _
      %p316 = scmp.le.s32.totalorder 1, %s16
      %p317 = scmp.lt.s32.totalorder %s16, 7
      %p318 = pnand %p316, %p317
      %p319 = pneg %p318
      // Predicated region
      $region49: #{ortho_loss_forward.1} parent=5 // pred_check
        _
      $region50: #{ortho_loss_forward.1} parent=5 // pred_check_branch
        %321 = sbr.rel (%p318) target = $region52
      $region51: #{ortho_loss_forward.1} parent=5 // pred_region
        %s322 = ssub.s32 %s16, 1
        // Predicated region
        $region53: #{ortho_loss_forward.1} parent=51 // pred_check
          %p323 = pneg %p105
        $region54: #{ortho_loss_forward.1} parent=51 // pred_check_branch
          %325 = sbr.rel (%p323) target = $region56
        $region55: #{ortho_loss_forward.1} parent=51 // pred_region
          %326 = dma.done [#allocation7], 512
        $region56: #{ortho_loss_forward.1} parent=51 // pred_fallthru
          _
        %s327 = ssub.s32 1, %s25
        %s328 = smul.u32 %s26, %s327
        %s329 = smul.u32 2, %s328
        %s330 = ssub.s32 5, %s329
        %p331 = scmp.lt.s32.totalorder %s330, 2
        %s332 = scalar_select %p331, %s330, 2
        %s333 = smul.u32 128, %s332
        %p334 = scmp.lt.s32.totalorder %s329, 4
        %s335 = scalar_select %p334, %s329, 4
        %s336 = smul.addr %s335, 8
        %s337 = scalar_lea.vmem %s0, %s336
        %p338 = pneg %p58
        %p339 = pneg %p55
        %s340 = smul.u32 2, %s26
        %s341 = ssub.s32 5, %s340
        %p342 = scmp.lt.s32.totalorder %s341, 2
        %s343 = scalar_select %p342, %s341, 2
        %s344 = smul.u32 128, %s343
        %p345 = scmp.lt.s32.totalorder %s340, 4
        %s346 = scalar_select %p345, %s340, 4
        %s347 = smul.addr %s346, 8
        %s348 = scalar_lea.vmem %s1, %s347
        %p349 = pneg %p84
        %p350 = pneg %p81
        %p351 = pneg %p105
        %p352 = pneg %p102
        %p353 = pneg %p126
        %p354 = pneg %p123
        %p355 = pneg %p147
        %p356 = pneg %p144
        %p357 = pneg %p168
        %p358 = pneg %p165
        %p359 = pneg %p189
        %p360 = pneg %p186
        %p361 = pneg %p210
        %p362 = pneg %p207
        %p363 = pneg %p231
        %p364 = pneg %p228
        %s365 = ssub.s32 1, %s25
        %s366 = smul.u32 %s26, %s365
        %s367 = smul.u32 2, %s366
        %s368 = ssub.s32 5, %s367
        %p369 = scmp.lt.s32.totalorder %s368, 2
        %s370 = scalar_select %p369, %s368, 2
        %s371 = smul.u32 128, %s370
        %p372 = scmp.lt.s32.totalorder %s367, 4
        %s373 = scalar_select %p372, %s367, 4
        %s374 = smul.addr %s373, 8
        %s375 = scalar_lea.vmem %s0, %s374
        %s376 = ssub.s32 1, %s25
        %s377 = smul.u32 %s26, %s376
        %s378 = smul.u32 2, %s377
        %s379 = ssub.s32 5, %s378
        %p380 = scmp.lt.s32.totalorder %s379, 2
        %s381 = scalar_select %p380, %s379, 2
        %s382 = smul.u32 128, %s381
        %s383 = smul.u32 2, %s26
        %s384 = ssub.s32 5, %s383
        %p385 = scmp.lt.s32.totalorder %s384, 2
        %s386 = scalar_select %p385, %s384, 2
        %s387 = smul.u32 128, %s386
        %p388 = scmp.lt.s32.totalorder %s383, 4
        %s389 = scalar_select %p388, %s383, 4
        %s390 = smul.addr %s389, 8
        %s391 = scalar_lea.vmem %s1, %s390
        %s392 = smul.u32 2, %s26
        %s393 = ssub.s32 5, %s392
        %p394 = scmp.lt.s32.totalorder %s393, 2
        %s395 = scalar_select %p394, %s393, 2
        %s396 = smul.u32 128, %s395
        %p397 = scmp.eq.s32.totalorder %s25, 0
        %p398 = scmp.eq.s32.totalorder %s26, 0
        %p399 = pnand %p397, %p398
        %p400 = pneg %p399
        // Predicated region
        $region57: #{ortho_loss_forward.1} parent=51 // pred_check
          _
        $region58: #{ortho_loss_forward.1} parent=51 // pred_check_branch
          %402 = sbr.rel (%p399) target = $region60
        $region59: #{ortho_loss_forward.1} parent=51 // pred_region
          %vm403 = vcmask 0
          %404 = vst.msk [vmem:[#allocation2] sm:$0x1] %vm403, 0.0
          %405 = vst.msk [vmem:[#allocation5] sm:$0x1] %vm403, 0.0
          %406 = vst [vmem:[#allocation3] sm:$0x1] 0.0
          %407 = vst [vmem:[#allocation4] sm:$0x1] 0.0
        $region60: #{ortho_loss_forward.1} parent=51 // pred_fallthru
          _
        %v408 = vld [vmem:[%s391] sm:$0xff]
        %v409 = vld [vmem:[%s391 + $0x8] sm:$0xff]
        %s410 = smul.u32 %s26, 16
        %v411 = vlaneseq
        %v412 = vshrl.u32 %v411, 7
        %v413 = vadd.s32 %v412, 8
        %v414 = vstv %s410
        %v415 = vadd.s32 %v414, %v412
        %v416 = vadd.s32 %v414, %v413
        %vm417 = vcmp.lt.s32.totalorder %v415, 40
        %vm418 = vcmp.lt.s32.totalorder %v416, 40
        %v419 = vld [vmem:[#allocation6] sm:$0xff]
        %v420 = vld [vmem:[#allocation6 + $0x8] sm:$0xff]
        %v421 = vld [vmem:[#allocation6 + $0x10] sm:$0xff]
        %v422 = vld [vmem:[#allocation6 + $0x18] sm:$0xff]
        %v423 = vld [vmem:[%s3] sm:$0x1]
        %v425 = vlaneseq
        %v426 = vshrl.u32 %v425, 7
        %v427 = vsub.s32 0, %v426
        %v428 = vrot.slane %v423, %v427
        %vm430 = vcmask 261120
        %v432 = vsel %vm430, %v408, 0
        %v435 = vsel %vm430, %v409, 0
        %437 = vmatprep.subr.mxu0 0.0
        %438 = vmatpush1.msra.mxu0 0.0
        %439 = vmatprep.subr.mxu0 0.0
        %440 = vmatpush1.msra.mxu0 0.0
        %441 = vmatprep.subr.mxu0 0.0
        %442 = vmatpush1.msra.mxu0 0.0
        %443 = vmatprep.subr.mxu0 0.0
        %444 = vmatpush1.msra.mxu0 0.0
        %445 = vmatprep.subr.mxu0 0.0
        %446 = vmatpush1.msra.mxu0 0.0
        %447 = vmatprep.subr.mxu0 0.0
        %448 = vmatpush1.msra.mxu0 0.0
        %449 = vmatprep.subr.mxu0 0.0
        %450 = vmatpush1.msra.mxu0 0.0
        %451 = vmatprep.subr.mxu0 0.0
        %452 = vmatpush1.msra.mxu0 0.0
        %453 = vmatprep.subr.mxu0 0.0
        %454 = vmatpush1.msra.mxu0 0.0
        %455 = vmatprep.subr.mxu0 0.0
        %456 = vmatpush1.msra.mxu0 0.0
        %457 = vmatprep.subr.mxu0 0.0
        %458 = vmatpush1.msra.mxu0 0.0
        %459 = vmatprep.subr.mxu0 0.0
        %460 = vmatpush1.msra.mxu0 0.0
        %461 = vmatprep.subr.mxu0 0.0
        %462 = vmatpush1.msra.mxu0 %v422
        %463 = vmatprep.subr.mxu0 0.0
        %464 = vmatpush1.msra.mxu0 %v421
        %465 = vmatprep.subr.mxu0 0.0
        %466 = vmatpush1.msra.mxu0 %v420
        %467 = vmatprep.subr.mxu0 0.0
        %468 = vmatpush1.msra.mxu0 %v419
        %469 = vmatprep.subr.mxu0 0.0
        %470 = vmatpush2.msra.mxu0 0.0
        %471 = vmatprep.subr.mxu0 0.0
        %472 = vmatpush2.msra.mxu0 0.0
        %473 = vmatprep.subr.mxu0 0.0
        %474 = vmatpush2.msra.mxu0 0.0
        %475 = vmatprep.subr.mxu0 0.0
        %476 = vmatpush2.msra.mxu0 0.0
        %477 = vmatprep.subr.mxu0 0.0
        %478 = vmatpush2.msra.mxu0 0.0
        %479 = vmatprep.subr.mxu0 0.0
        %480 = vmatpush2.msra.mxu0 0.0
        %481 = vmatprep.subr.mxu0 0.0
        %482 = vmatpush2.msra.mxu0 0.0
        %483 = vmatprep.subr.mxu0 0.0
        %484 = vmatpush2.msra.mxu0 0.0
        %485 = vmatprep.subr.mxu0 0.0
        %486 = vmatpush2.msra.mxu0 0.0
        %487 = vmatprep.subr.mxu0 0.0
        %488 = vmatpush2.msra.mxu0 0.0
        %489 = vmatprep.subr.mxu0 0.0
        %490 = vmatpush2.msra.mxu0 0.0
        %491 = vmatprep.subr.mxu0 0.0
        %492 = vmatpush2.msra.mxu0 0.0
        %493 = vmatprep.subr.mxu0 0.0
        %494 = vmatpush2.msra.mxu0 0.0
        %495 = vmatprep.subr.mxu0 0.0
        %496 = vmatpush2.msra.mxu0 0.0
        %497 = vmatprep.subr.mxu0 0.0
        %498 = vmatpush2.msra.mxu0 0.0
        %499 = vmatprep.subr.mxu0 0.0
        %500 = vmatpush2.msra.mxu0 0.0
        %501 = vmatprep.mubr.f32.mxu0 0.0
        %502 = vmatmul.mubr.f32.gmra.mxu0 %v432
        %v503 = vpop.f32.mrf.mxu0
        %v504 = vadd.f32 %v428, %v503
        %v505 = vpop.f32.mrf.mxu0
        %506 = vmatprep.mubr.f32.mxu0 0.0
        %507 = vmatmul.mubr.f32.gmra.mxu0 %v435
        %v508 = vpop.f32.mrf.mxu0
        %v509 = vadd.f32 %v428, %v508
        %v510 = vpop.f32.mrf.mxu0
        %511 = vdwg.mxu0
        %v512 = vtanh.pop %v504
        %v513 = vtanh.pop %v509
        %v514 = vsel %vm417, 1, 0
        %v515 = vsel %vm418, 1, 0
        %vm516 = vcmp.eq.s32.totalorder %v514, 1
        %vm517 = vcmp.eq.s32.totalorder %v515, 1
        %v518 = vsel %vm516, %v512, 0.0
        %v519 = vsel %vm517, %v513, 0.0
        // Predicated region
        $region61: #{ortho_loss_forward.1} parent=51 // pred_check
          %p520 = pneg %p397
        $region62: #{ortho_loss_forward.1} parent=51 // pred_check_branch
          %522 = sbr.rel (%p520) target = $region64
        $region63: #{ortho_loss_forward.1} parent=51 // pred_region
          %v523 = vld [vmem:[%s375] sm:$0xff]
          %v524 = vld [vmem:[%s375 + $0x8] sm:$0xff]
          %v525 = vsub.f32 %v523, %v408
          %v526 = vsub.f32 %v524, %v409
          %v527 = vsel %vm516, %v525, 0.0
          %v528 = vsel %vm517, %v526, 0.0
          %v529 = vld [vmem:[#allocation2] sm:$0x1]
          %v530 = vmul.f32 %v527, %v527
          %v531 = vmul.f32 %v528, %v528
          %v532 = vsel %vm430, %v530, 0.0
          %v533 = vsel %vm430, %v531, 0.0
          %v534 = vadd.f32 %v532, %v533
          %535 = vadd.xlane.f32.xlu0 %v534
          %v536 = vpop.xlane.xlu0 %535
          %v537 = vrot.slane %v536, 4
          %v538 = vadd.f32 %v536, %v537
          %v539 = vrot.slane %v538, 2
          %v540 = vadd.f32 %v538, %v539
          %v541 = vrot.slane %v540, 1
          %v542 = vadd.f32 %v540, %v541
          %s543 = vtos %v542
          %v544 = vstv %s543
          %v545 = vadd.f32 %v529, %v544
          %vm546 = vcmask 0
          %547 = vst.msk [vmem:[#allocation2] sm:$0x1] %vm546, %v545
          %v548 = vld [vmem:[#allocation3] sm:$0x1]
          %vm549 = vcmask 130048
          %v551 = vsel %vm549, 1.0, 0
          %553 = vmatprep.subr.mxu0 0.0
          %554 = vmatpush1.msra.mxu0 0.0
          %555 = vmatprep.subr.mxu0 0.0
          %556 = vmatpush1.msra.mxu0 0.0
          %557 = vmatprep.subr.mxu0 0.0
          %558 = vmatpush1.msra.mxu0 0.0
          %559 = vmatprep.subr.mxu0 0.0
          %560 = vmatpush1.msra.mxu0 0.0
          %561 = vmatprep.subr.mxu0 0.0
          %562 = vmatpush1.msra.mxu0 0.0
          %563 = vmatprep.subr.mxu0 0.0
          %564 = vmatpush1.msra.mxu0 0.0
          %565 = vmatprep.subr.mxu0 0.0
          %566 = vmatpush1.msra.mxu0 0.0
          %567 = vmatprep.subr.mxu0 0.0
          %568 = vmatpush1.msra.mxu0 0.0
          %569 = vmatprep.subr.mxu0 0.0
          %570 = vmatpush1.msra.mxu0 0.0
          %571 = vmatprep.subr.mxu0 0.0
          %572 = vmatpush1.msra.mxu0 0.0
          %573 = vmatprep.subr.mxu0 0.0
          %574 = vmatpush1.msra.mxu0 0.0
          %575 = vmatprep.subr.mxu0 0.0
          %576 = vmatpush1.msra.mxu0 0.0
          %577 = vmatprep.subr.mxu0 0.0
          %578 = vmatpush1.msra.mxu0 0.0
          %579 = vmatprep.subr.mxu0 0.0
          %580 = vmatpush1.msra.mxu0 0.0
          %581 = vmatprep.subr.mxu0 0.0
          %582 = vmatpush1.msra.mxu0 %v519
          %583 = vmatprep.subr.mxu0 0.0
          %584 = vmatpush1.msra.mxu0 %v518
          %585 = vmatprep.subr.mxu0 0.0
          %586 = vmatpush2.msra.mxu0 0.0
          %587 = vmatprep.subr.mxu0 0.0
          %588 = vmatpush2.msra.mxu0 0.0
          %589 = vmatprep.subr.mxu0 0.0
          %590 = vmatpush2.msra.mxu0 0.0
          %591 = vmatprep.subr.mxu0 0.0
          %592 = vmatpush2.msra.mxu0 0.0
          %593 = vmatprep.subr.mxu0 0.0
          %594 = vmatpush2.msra.mxu0 0.0
          %595 = vmatprep.subr.mxu0 0.0
          %596 = vmatpush2.msra.mxu0 0.0
          %597 = vmatprep.subr.mxu0 0.0
          %598 = vmatpush2.msra.mxu0 0.0
          %599 = vmatprep.subr.mxu0 0.0
          %600 = vmatpush2.msra.mxu0 0.0
          %601 = vmatprep.subr.mxu0 0.0
          %602 = vmatpush2.msra.mxu0 0.0
          %603 = vmatprep.subr.mxu0 0.0
          %604 = vmatpush2.msra.mxu0 0.0
          %605 = vmatprep.subr.mxu0 0.0
          %606 = vmatpush2.msra.mxu0 0.0
          %607 = vmatprep.subr.mxu0 0.0
          %608 = vmatpush2.msra.mxu0 0.0
          %609 = vmatprep.subr.mxu0 0.0
          %610 = vmatpush2.msra.mxu0 0.0
          %611 = vmatprep.subr.mxu0 0.0
          %612 = vmatpush2.msra.mxu0 0.0
          %613 = vmatprep.subr.mxu0 0.0
          %614 = vmatpush2.msra.mxu0 0.0
          %615 = vmatprep.subr.mxu0 0.0
          %616 = vmatpush2.msra.mxu0 0.0
          %617 = vmatprep.mubr.f32.mxu0 0.0
          %618 = vmatmul.mubr.f32.gmra.mxu0 %v551
          %v619 = vpop.f32.mrf.mxu0
          %v620 = vadd.f32 0.0, %v619
          %v621 = vpop.f32.mrf.mxu0
          %622 = vdwg.mxu0
          %v623 = vadd.f32 %v548, %v620
          %624 = vst [vmem:[#allocation3] sm:$0x1] %v623
          %v625 = vld [vmem:[#allocation4] sm:$0x1]
          %v626 = vmul.f32 %v518, %v518
          %v627 = vmul.f32 %v519, %v519
          %628 = vmatprep.subr.mxu0 0.0
          %629 = vmatpush1.msra.mxu0 0.0
          %630 = vmatprep.subr.mxu0 0.0
          %631 = vmatpush1.msra.mxu0 0.0
          %632 = vmatprep.subr.mxu0 0.0
          %633 = vmatpush1.msra.mxu0 0.0
          %634 = vmatprep.subr.mxu0 0.0
          %635 = vmatpush1.msra.mxu0 0.0
          %636 = vmatprep.subr.mxu0 0.0
          %637 = vmatpush1.msra.mxu0 0.0
          %638 = vmatprep.subr.mxu0 0.0
          %639 = vmatpush1.msra.mxu0 0.0
          %640 = vmatprep.subr.mxu0 0.0
          %641 = vmatpush1.msra.mxu0 0.0
          %642 = vmatprep.subr.mxu0 0.0
          %643 = vmatpush1.msra.mxu0 0.0
          %644 = vmatprep.subr.mxu0 0.0
          %645 = vmatpush1.msra.mxu0 0.0
          %646 = vmatprep.subr.mxu0 0.0
          %647 = vmatpush1.msra.mxu0 0.0
          %648 = vmatprep.subr.mxu0 0.0
          %649 = vmatpush1.msra.mxu0 0.0
          %650 = vmatprep.subr.mxu0 0.0
          %651 = vmatpush1.msra.mxu0 0.0
          %652 = vmatprep.subr.mxu0 0.0
          %653 = vmatpush1.msra.mxu0 0.0
          %654 = vmatprep.subr.mxu0 0.0
          %655 = vmatpush1.msra.mxu0 0.0
          %656 = vmatprep.subr.mxu0 0.0
          %657 = vmatpush1.msra.mxu0 %v627
          %658 = vmatprep.subr.mxu0 0.0
          %659 = vmatpush1.msra.mxu0 %v626
          %660 = vmatprep.subr.mxu0 0.0
          %661 = vmatpush2.msra.mxu0 0.0
          %662 = vmatprep.subr.mxu0 0.0
          %663 = vmatpush2.msra.mxu0 0.0
          %664 = vmatprep.subr.mxu0 0.0
          %665 = vmatpush2.msra.mxu0 0.0
          %666 = vmatprep.subr.mxu0 0.0
          %667 = vmatpush2.msra.mxu0 0.0
          %668 = vmatprep.subr.mxu0 0.0
          %669 = vmatpush2.msra.mxu0 0.0
          %670 = vmatprep.subr.mxu0 0.0
          %671 = vmatpush2.msra.mxu0 0.0
          %672 = vmatprep.subr.mxu0 0.0
          %673 = vmatpush2.msra.mxu0 0.0
          %674 = vmatprep.subr.mxu0 0.0
          %675 = vmatpush2.msra.mxu0 0.0
          %676 = vmatprep.subr.mxu0 0.0
          %677 = vmatpush2.msra.mxu0 0.0
          %678 = vmatprep.subr.mxu0 0.0
          %679 = vmatpush2.msra.mxu0 0.0
          %680 = vmatprep.subr.mxu0 0.0
          %681 = vmatpush2.msra.mxu0 0.0
          %682 = vmatprep.subr.mxu0 0.0
          %683 = vmatpush2.msra.mxu0 0.0
          %684 = vmatprep.subr.mxu0 0.0
          %685 = vmatpush2.msra.mxu0 0.0
          %686 = vmatprep.subr.mxu0 0.0
          %687 = vmatpush2.msra.mxu0 0.0
          %688 = vmatprep.subr.mxu0 0.0
          %689 = vmatpush2.msra.mxu0 0.0
          %690 = vmatprep.subr.mxu0 0.0
          %691 = vmatpush2.msra.mxu0 0.0
          %692 = vmatprep.mubr.f32.mxu0 0.0
          %693 = vmatmul.mubr.f32.gmra.mxu0 %v551
          %v694 = vpop.f32.mrf.mxu0
          %v695 = vadd.f32 0.0, %v694
          %v696 = vpop.f32.mrf.mxu0
          %697 = vdwg.mxu0
          %v698 = vadd.f32 %v625, %v695
          %699 = vst [vmem:[#allocation4] sm:$0x1] %v698
        $region64: #{ortho_loss_forward.1} parent=51 // pred_fallthru
          _
        %p700 = scmp.eq.s32.totalorder %s25, 1
        // Predicated region
        $region65: #{ortho_loss_forward.1} parent=51 // pred_check
          %p701 = pneg %p700
        $region66: #{ortho_loss_forward.1} parent=51 // pred_check_branch
          %703 = sbr.rel (%p701) target = $region68
        $region67: #{ortho_loss_forward.1} parent=51 // pred_region
          %v704 = vld [vmem:[#allocation3] sm:$0x1]
          %v705 = vmul.f32 %v704, 0.025
          %v706 = vld [vmem:[#allocation4] sm:$0x1]
          %v707 = vmul.f32 %v706, 0.025
          %v708 = vmul.f32 %v705, %v705
          %v709 = vsub.f32 %v707, %v708
          %v710 = vmax.f32 %v709, 0.0
          %v712 = vlaneseq
          %v713 = vshrl.u32 %v712, 7
          %v714 = vsub.s32 0, %v713
          %v715 = vrot.slane %v705, %v714
          %v717 = vsub.f32 %v518, %v715
          %v718 = vsub.f32 %v519, %v715
          %v719 = vadd.f32 %v710, 1e-05
          %v720 = vrsqrt.pop %v719
          %v722 = vlaneseq
          %v723 = vshrl.u32 %v722, 7
          %v724 = vsub.s32 0, %v723
          %v725 = vrot.slane %v720, %v724
          %v727 = vmul.f32 %v717, %v725
          %v728 = vmul.f32 %v718, %v725
          %v729 = vld [vmem:[%s4] sm:$0x1]
          %v731 = vlaneseq
          %v732 = vshrl.u32 %v731, 7
          %v733 = vsub.s32 0, %v732
          %v734 = vrot.slane %v729, %v733
          %v736 = vmul.f32 %v727, %v734
          %v737 = vmul.f32 %v728, %v734
          %v738 = vld [vmem:[%s5] sm:$0x1]
          %v740 = vlaneseq
          %v741 = vshrl.u32 %v740, 7
          %v742 = vsub.s32 0, %v741
          %v743 = vrot.slane %v738, %v742
          %v745 = vadd.f32 %v736, %v743
          %v746 = vadd.f32 %v737, %v743
          %v747 = vld [vmem:[%s6] sm:$0xff]
          %v748 = vld [vmem:[%s6 + $0x8] sm:$0xff]
          %v749 = vld [vmem:[%s6 + $0x10] sm:$0xff]
          %v750 = vld [vmem:[%s6 + $0x18] sm:$0xff]
          %v751 = vld [vmem:[%s6 + $0x20] sm:$0xff]
          %v752 = vld [vmem:[%s6 + $0x28] sm:$0xff]
          %v753 = vld [vmem:[%s6 + $0x30] sm:$0xff]
          %v754 = vld [vmem:[%s6 + $0x38] sm:$0xff]
          %v755 = vld [vmem:[%s6 + $0x40] sm:$0xff]
          %v756 = vld [vmem:[%s6 + $0x48] sm:$0xff]
          %v757 = vld [vmem:[%s6 + $0x50] sm:$0xff]
          %v758 = vld [vmem:[%s6 + $0x58] sm:$0xff]
          %v759 = vld [vmem:[%s6 + $0x60] sm:$0xff]
          %v760 = vld [vmem:[%s6 + $0x68] sm:$0xff]
          %v761 = vld [vmem:[%s6 + $0x70] sm:$0xff]
          %v762 = vld [vmem:[%s6 + $0x78] sm:$0xff]
          %v763 = vld [vmem:[%s7] sm:$0x1]
          %v765 = vlaneseq
          %v766 = vshrl.u32 %v765, 7
          %v767 = vsub.s32 0, %v766
          %v768 = vrot.slane %v763, %v767
          %770 = vmatprep.subr.mxu0 0.0
          %771 = vmatpush1.msra.mxu0 %v762
          %772 = vmatprep.subr.mxu0 0.0
          %773 = vmatpush1.msra.mxu0 %v761
          %774 = vmatprep.subr.mxu0 0.0
          %775 = vmatpush1.msra.mxu0 %v760
          %776 = vmatprep.subr.mxu0 0.0
          %777 = vmatpush1.msra.mxu0 %v759
          %778 = vmatprep.subr.mxu0 0.0
          %779 = vmatpush1.msra.mxu0 %v758
          %780 = vmatprep.subr.mxu0 0.0
          %781 = vmatpush1.msra.mxu0 %v757
          %782 = vmatprep.subr.mxu0 0.0
          %783 = vmatpush1.msra.mxu0 %v756
          %784 = vmatprep.subr.mxu0 0.0
          %785 = vmatpush1.msra.mxu0 %v755
          %786 = vmatprep.subr.mxu0 0.0
          %787 = vmatpush1.msra.mxu0 %v754
          %788 = vmatprep.subr.mxu0 0.0
          %789 = vmatpush1.msra.mxu0 %v753
          %790 = vmatprep.subr.mxu0 0.0
          %791 = vmatpush1.msra.mxu0 %v752
          %792 = vmatprep.subr.mxu0 0.0
          %793 = vmatpush1.msra.mxu0 %v751
          %794 = vmatprep.subr.mxu0 0.0
          %795 = vmatpush1.msra.mxu0 %v750
          %796 = vmatprep.subr.mxu0 0.0
          %797 = vmatpush1.msra.mxu0 %v749
          %798 = vmatprep.subr.mxu0 0.0
          %799 = vmatpush1.msra.mxu0 %v748
          %800 = vmatprep.subr.mxu0 0.0
          %801 = vmatpush1.msra.mxu0 %v747
          %802 = vmatprep.subr.mxu0 0.0
          %803 = vmatpush2.msra.mxu0 0.0
          %804 = vmatprep.subr.mxu0 0.0
          %805 = vmatpush2.msra.mxu0 0.0
          %806 = vmatprep.subr.mxu0 0.0
          %807 = vmatpush2.msra.mxu0 0.0
          %808 = vmatprep.subr.mxu0 0.0
          %809 = vmatpush2.msra.mxu0 0.0
          %810 = vmatprep.subr.mxu0 0.0
          %811 = vmatpush2.msra.mxu0 0.0
          %812 = vmatprep.subr.mxu0 0.0
          %813 = vmatpush2.msra.mxu0 0.0
          %814 = vmatprep.subr.mxu0 0.0
          %815 = vmatpush2.msra.mxu0 0.0
          %816 = vmatprep.subr.mxu0 0.0
          %817 = vmatpush2.msra.mxu0 0.0
          %818 = vmatprep.subr.mxu0 0.0
          %819 = vmatpush2.msra.mxu0 0.0
          %820 = vmatprep.subr.mxu0 0.0
          %821 = vmatpush2.msra.mxu0 0.0
          %822 = vmatprep.subr.mxu0 0.0
          %823 = vmatpush2.msra.mxu0 0.0
          %824 = vmatprep.subr.mxu0 0.0
          %825 = vmatpush2.msra.mxu0 0.0
          %826 = vmatprep.subr.mxu0 0.0
          %827 = vmatpush2.msra.mxu0 0.0
          %828 = vmatprep.subr.mxu0 0.0
          %829 = vmatpush2.msra.mxu0 0.0
          %830 = vmatprep.subr.mxu0 0.0
          %831 = vmatpush2.msra.mxu0 0.0
          %832 = vmatprep.subr.mxu0 0.0
          %833 = vmatpush2.msra.mxu0 0.0
          %834 = vmatprep.mubr.f32.mxu0 0.0
          %835 = vmatmul.mubr.f32.gmra.mxu0 %v745
          %v836 = vpop.f32.mrf.mxu0
          %v837 = vadd.f32 %v768, %v836
          %v838 = vpop.f32.mrf.mxu0
          %839 = vmatprep.mubr.f32.mxu0 0.0
          %840 = vmatmul.mubr.f32.gmra.mxu0 %v746
          %v841 = vpop.f32.mrf.mxu0
          %v842 = vadd.f32 %v768, %v841
          %v843 = vpop.f32.mrf.mxu0
          %844 = vdwg.mxu0
          %v845 = vtanh.pop %v837
          %v846 = vtanh.pop %v842
          %v847 = vmul.f32 %v845, %v845
          %v848 = vmul.f32 %v846, %v846
          %849 = vadd.xlane.f32.xlu0 %v847
          %v850 = vpop.xlane.xlu0 %849
          %851 = vadd.xlane.f32.xlu0 %v848
          %v852 = vpop.xlane.xlu0 %851
          %v853 = vsel %vm417, %v850, 0.0
          %v854 = vsel %vm418, %v852, 0.0
          %v855 = vld [vmem:[#allocation5] sm:$0x1]
          %vm856 = vcmask 7168
          %v857 = vsel %vm856, %v853, 0.0
          %v858 = vsel %vm856, %v854, 0.0
          %v859 = vadd.f32 %v857, %v858
          %860 = vadd.xlane.f32.xlu0 %v859
          %v861 = vpop.xlane.xlu0 %860
          %v862 = vrot.slane %v861, 4
          %v863 = vadd.f32 %v861, %v862
          %v864 = vrot.slane %v863, 2
          %v865 = vadd.f32 %v863, %v864
          %v866 = vrot.slane %v865, 1
          %v867 = vadd.f32 %v865, %v866
          %s868 = vtos %v867
          %v869 = vstv %s868
          %v870 = vadd.f32 %v855, %v869
          %vm871 = vcmask 0
          %872 = vst.msk [vmem:[#allocation5] sm:$0x1] %vm871, %v870
          %p873 = scmp.eq.s32.totalorder %s26, 2
          // Predicated region
          $region69: #{ortho_loss_forward.1} parent=67 // pred_check
            %p874 = pneg %p873
          $region70: #{ortho_loss_forward.1} parent=67 // pred_check_branch
            %876 = sbr.rel (%p874) target = $region72
          $region71: #{ortho_loss_forward.1} parent=67 // pred_region
            %v877 = vld [vmem:[#allocation2] sm:$0x1]
            %v878 = vmul.f32 %v877, 0.00078125
            %v879 = vld [vmem:[#allocation5] sm:$0x1]
            %v880 = vmul.f32 %v879, 0.025
            %v881 = vsub.f32 %v880, 1.0
            %v882 = vmul.f32 %v881, 0.5
            %v883 = vadd.f32 %v878, %v882
            %884 = vst.msk [vmem:[#allocation9] sm:$0x1] %vm871, %v883
          $region72: #{ortho_loss_forward.1} parent=67 // pred_fallthru
            _
        $region68: #{ortho_loss_forward.1} parent=51 // pred_fallthru
          _
        // Predicated region
        $region73: #{ortho_loss_forward.1} parent=51 // pred_check
          %p885 = pneg %p228
        $region74: #{ortho_loss_forward.1} parent=51 // pred_check_branch
          %887 = sbr.rel (%p885) target = $region76
        $region75: #{ortho_loss_forward.1} parent=51 // pred_region
          %s889 = ssub.s32 16, 16
          %890 = vsyncadd [#allocation8], %s889
          %s892 = sshll.u32 [#allocation9], 4
          %s893 = int_to_ptr.vmem [resolvable:$true] %s892
          %895 = dma.vmem_to_hbm [thread:$0]  %s893, 16, %s8, [#allocation8]
        $region76: #{ortho_loss_forward.1} parent=51 // pred_fallthru
          _
        // Predicated region
        $region77: #{ortho_loss_forward.1} parent=51 // pred_check
          %p896 = pneg %p228
        $region78: #{ortho_loss_forward.1} parent=51 // pred_check_branch
          %898 = sbr.rel (%p896) target = $region80
        $region79: #{ortho_loss_forward.1} parent=51 // pred_region
          %899 = dma.done [#allocation8], 16
        $region80: #{ortho_loss_forward.1} parent=51 // pred_fallthru
          _
      $region52: #{ortho_loss_forward.1} parent=5 // pred_fallthru
        _
      %p900 = scmp.le.s32.totalorder 2, %s16
      // Predicated region
      $region81: #{ortho_loss_forward.1} parent=5 // pred_check
        %p901 = pneg %p900
      $region82: #{ortho_loss_forward.1} parent=5 // pred_check_branch
        %903 = sbr.rel (%p901) target = $region84
      $region83: #{ortho_loss_forward.1} parent=5 // pred_region
        %s904 = ssub.s32 %s16, 2
      $region84: #{ortho_loss_forward.1} parent=5 // pred_fallthru
        _
    $region6: #{ortho_loss_forward.1} parent=1 // loop_footer
      %s20 = sadd.s32 1, %s16
    $region7: #{ortho_loss_forward.1} parent=1 // loop_footer_branch
      %15 = sbr.rel target = $region3
    $region8: #{ortho_loss_forward.1} parent=1 // loop_exit
      _
    %905 = vsyncpa [#allocation7], 1
    %s906 = scalar_lea.sflag [#allocation7], 1
    %907 = vsyncpa %s906, 1
    %908 = vsyncpa [#allocation8], 1
    %s909 = scalar_lea.sflag [#allocation8], 1
    %910 = vsyncpa %s909, 1

</llo_original>
